<compile_context>
chip_gen: v7x
topology: tpu7x:2x2x1
jax: 0.10.0
libtpu: 0.0.40
codegen_flags: <defaults>
</compile_context>

<pallas_src>
import jax
import jax.numpy as jnp
from jax.experimental import pallas as pl
from jax.experimental.pallas import tpu as pltpu


_DEFAULT_TARGET_BYTES = 4 * 1024 * 1024   # per-block target (amortize ~0.35us/step)
_EMB_RESIDENT_LIMIT = 4 * 1024 * 1024     # keep emb fully VMEM-resident when this small
_VMEM_LIMIT_CAP = 48 * 1024 * 1024        # stay under v7x's 64 MiB physical VMEM


# ---------------------------------------------------------------------------
# Tile selection
# ---------------------------------------------------------------------------
def _sublane_multiple(itemsize):
    # f32 -> 8, bf16 -> 16, int8/fp8 -> 32 (packed rows per sublane).
    return max(8, 32 // int(itemsize))


def _choose_tiles(B, T, HWC, itemsize, target_bytes):
    """Pick (tB, tT, tC) so one block is ~target_bytes, aligned to (sublane, 128)."""
    sub = _sublane_multiple(itemsize)
    row_bytes = HWC * itemsize
    tB = 1
    min_t_rows = min(T, sub)
    if min_t_rows * row_bytes > target_bytes:
        # Even `sub` rows are too big: tile the lane (HWC) axis in multiples of 128.
        tT = min_t_rows
        per_col128 = tT * 128 * itemsize
        tC = max(128, (target_bytes // per_col128) * 128)
        tC = min(tC, HWC)
    elif T * row_bytes > target_bytes:
        # Tile along T in multiples of `sub` (prefer an exact divisor of T).
        tC = HWC
        budget_rows = max(sub, (target_bytes // row_bytes) // sub * sub)
        tT = None
        for cand in range(sub, min(T, budget_rows) + 1, sub):
            if T % cand == 0:
                tT = cand
        if tT is None:
            tT = min(budget_rows, T)  # non-dividing tile -> cdiv grid, Pallas pads edge
    else:
        # Whole (T, HWC) slab fits in one block; fold batch for fatter blocks,
        # but keep >= 2 grid steps so both v7x TensorCores get work.
        tT, tC = T, HWC
        slab = T * row_bytes
        max_tB = min(max(1, target_bytes // slab), max(1, B // 2))
        for cand in range(1, int(max_tB) + 1):
            if B % cand == 0:
                tB = cand
    return int(tB), int(tT), int(tC)


# ---------------------------------------------------------------------------
# Kernel factory (all branches resolved at trace time)
# ---------------------------------------------------------------------------
def _make_kernel(fold_b, resident, T, HWC, tT, tC):
    def kernel(x_ref, emb_ref, o_ref):
        if resident:
            if tT == T and tC == HWC:
                emb = emb_ref[...]
            else:
                t0 = pl.multiple_of(pl.program_id(0) * tT, tT)
                c0 = pl.multiple_of(pl.program_id(1) * tC, tC)
                emb = emb_ref[pl.ds(t0, tT), pl.ds(c0, tC)]
        else:
            emb = emb_ref[...]
        if fold_b:
            o_ref[...] = x_ref[...] + emb[None, :, :]
        else:
            o_ref[...] = x_ref[...] + emb
    return kernel


# ---------------------------------------------------------------------------
# pallas_call wrapper
# ---------------------------------------------------------------------------
def _add_pos_embed(x, emb, *, target_bytes=_DEFAULT_TARGET_BYTES,
                   emb_resident_limit=_EMB_RESIDENT_LIMIT):
    """x: (B, T, H, W, C); emb: (T, H, W, C). Returns x + emb[None]."""
    B, T, H, W, C = x.shape
    HWC = H * W * C
    itemsize = x.dtype.itemsize

    # Lane-dense layout: H*W*C maps onto the lane axis -> unmasked full-width vst.
    x_flat = x.reshape(B, T, HWC)
    emb_flat = emb.reshape(T, HWC).astype(x.dtype)

    tB, tT, tC = _choose_tiles(B, T, HWC, itemsize, target_bytes)
    nB = B // tB
    nT = (T + tT - 1) // tT
    nC = (HWC + tC - 1) // tC

    emb_bytes = T * HWC * itemsize
    resident = (emb_bytes <= emb_resident_limit) and (T % tT == 0) and (HWC % tC == 0)
    fold_b = tB > 1

    # Grid is (nT, nC, nB) with the batch axis varying fastest, so the emb block
    # index is constant across consecutive steps: the embedding is streamed from
    # HBM ~once total (resident: literally a single DMA, stays in VMEM).
    if fold_b:
        x_spec = pl.BlockSpec((tB, tT, tC), lambda t, c, b: (b, t, c))
    else:
        # Squeeze the size-1 batch dim -> plain 2D vld/vadd/vst body.
        x_spec = pl.BlockSpec((None, tT, tC), lambda t, c, b: (b, t, c))
    if resident:
        emb_spec = pl.BlockSpec((T, HWC), lambda t, c, b: (0, 0))
        emb_block_bytes = emb_bytes
    else:
        emb_spec = pl.BlockSpec((tT, tC), lambda t, c, b: (t, c))
        emb_block_bytes = tT * tC * itemsize

    # Explicit scoped-VMEM limit: x-in + out double-buffered, emb conservatively
    # counted double-buffered, plus headroom.  Portable across 16/32/32 MiB
    # scoped defaults on v5e/v6e/v7x without exceeding v7x's 64 MiB physical.
    x_block_bytes = tB * tT * tC * itemsize
    vmem_needed = 4 * x_block_bytes + 2 * emb_block_bytes
    vmem_limit = min(max(int(vmem_needed * 1.3) + (1 << 20), 16 << 20), _VMEM_LIMIT_CAP)

    kernel = _make_kernel(fold_b, resident, T, HWC, tT, tC)

    out = pl.pallas_call(
        kernel,
        out_shape=jax.ShapeDtypeStruct((B, T, HWC), x.dtype),
        grid=(nT, nC, nB),
        in_specs=[x_spec, emb_spec],
        out_specs=x_spec,
        compiler_params=pltpu.CompilerParams(
            dimension_semantics=("parallel", "parallel", "parallel"),
            vmem_limit_bytes=vmem_limit,
        ),
        cost_estimate=pl.CostEstimate(
            flops=B * T * HWC,
            transcendentals=0,
            bytes_accessed=(2 * B * T * HWC + T * HWC) * itemsize,
        ),
    )(x_flat, emb_flat)
    return out.reshape(B, T, H, W, C)


# ---------------------------------------------------------------------------
# Public wrappers (match PosEmbed.forward for the two `typ` modes)
# ---------------------------------------------------------------------------
def pos_embed_thw(x, T_table, H_table, W_table, **kw):
    """typ == 't+h+w'. x: (B, T, H, W, C)."""
    _, T, H, W, _ = x.shape
    # arange-indexed nn.Embedding lookups are pure slices (tiny glue, not hot path).
    emb = (
        T_table[:T][:, None, None, :]
        + H_table[:H][None, :, None, :]
        + W_table[:W][None, None, :, :]
    )  # (T, H, W, C)
    return _add_pos_embed(x, emb, **kw)


def pos_embed_t_hw(x, T_table, HW_table, maxW, **kw):
    """typ == 't+hw'. x: (B, T, H, W, C). HW_table: (maxH*maxW, C)."""
    _, T, H, W, C = x.shape
    maxH = HW_table.shape[0] // maxW
    # spatial_idx[h, w] = h*maxW + w  ==  contiguous slice of the reshaped table.
    hw_emb = HW_table.reshape(maxH, maxW, C)[:H, :W]          # (H, W, C)
    emb = T_table[:T][:, None, None, :] + hw_emb              # (T, H, W, C)
    return _add_pos_embed(x, emb, **kw)


# ---------------------------------------------------------------------------
# Main
# ---------------------------------------------------------------------------
if __name__ == "__main__":
    B, T, H, W, C = 4, 8, 16, 16, 32
    maxT, maxH, maxW = 16, 32, 32  # embedding table extents >= runtime T/H/W

    key = jax.random.PRNGKey(0)
    kx, kt, kh, kw, khw = jax.random.split(key, 5)

    x = jax.random.normal(kx, (B, T, H, W, C), dtype=jnp.float32)
    T_table = 0.02 * jax.random.normal(kt, (maxT, C), dtype=jnp.float32)
    H_table = 0.02 * jax.random.normal(kh, (maxH, C), dtype=jnp.float32)
    W_table = 0.02 * jax.random.normal(kw, (maxW, C), dtype=jnp.float32)
    HW_table = 0.02 * jax.random.normal(khw, (maxH * maxW, C), dtype=jnp.float32)

    # --- typ == 't+h+w' (default: whole (T,HWC) slab + batch folding, resident emb)
    out_thw = jax.block_until_ready(pos_embed_thw(x, T_table, H_table, W_table))
    ref_thw = (
        x
        + T_table[:T][:, None, None, :]
        + H_table[:H][None, :, None, :]
        + W_table[:W][None, None, :, :]
    )
    assert out_thw.shape == x.shape and out_thw.dtype == x.dtype
    assert jnp.allclose(out_thw, ref_thw, atol=1e-5, rtol=1e-5)

    # --- typ == 't+hw' (small target -> lane-axis tiling + resident-emb slicing path)
    out_t_hw = jax.block_until_ready(
        pos_embed_t_hw(x, T_table, HW_table, maxW, target_bytes=128 * 1024))
    spatial_idx = jnp.arange(H)[:, None] * maxW + jnp.arange(W)[None, :]
    ref_t_hw = x + T_table[:T][:, None, None, :] + HW_table[spatial_idx]
    assert out_t_hw.shape == x.shape and out_t_hw.dtype == x.dtype
    assert jnp.allclose(out_t_hw, ref_t_hw, atol=1e-5, rtol=1e-5)

    # --- exercise the streamed (non-resident, tiled) emb path as well
    out_stream = jax.block_until_ready(
        pos_embed_thw(x, T_table, H_table, W_table,
                      target_bytes=128 * 1024, emb_resident_limit=0))
    assert jnp.allclose(out_stream, ref_thw, atol=1e-5, rtol=1e-5)

    print("KERNEL_OK")
</pallas_src>

<mosaic_0001>
module attributes {stable_mosaic.version = 11 : i64} {
  func.func @kernel(%arg0: i32, %arg1: i32, %arg2: i32, %arg3: memref<2x8x8192xf32, #tpu.memory_space<vmem>>, %arg4: memref<8x8192xf32, #tpu.memory_space<vmem>>, %arg5: memref<2x8x8192xf32, #tpu.memory_space<vmem>>) attributes {dimension_semantics = [#tpu.dimension_semantics<parallel>, #tpu.dimension_semantics<parallel>, #tpu.dimension_semantics<parallel>], iteration_bounds = array<i64: 1, 1, 2>, scalar_prefetch = 0 : i64, scratch_operands = 0 : i64, tpu.core_type = #tpu.core_type<tc>, window_params = [{transform_indices = @transform_0, window_bounds = array<i64: 2, 8, 8192>}, {pipeline_mode = #tpu.pipeline_mode<synchronous>, transform_indices = @transform_1, window_bounds = array<i64: 8, 8192>}, {transform_indices = @transform_2, window_bounds = array<i64: 2, 8, 8192>}]} {
    %c0 = arith.constant 0 : index
    %c0_0 = arith.constant 0 : index
    %0 = vector.load %arg4[%c0, %c0_0] : memref<8x8192xf32, #tpu.memory_space<vmem>>, vector<8x8192xf32>
    %c0_1 = arith.constant 0 : index
    %c0_2 = arith.constant 0 : index
    %c0_3 = arith.constant 0 : index
    %1 = vector.load %arg3[%c0_1, %c0_2, %c0_3] : memref<2x8x8192xf32, #tpu.memory_space<vmem>>, vector<2x8x8192xf32>
    %2 = vector.shape_cast %0 : vector<8x8192xf32> to vector<1x8x8192xf32>
    %3 = vector.broadcast %2 : vector<1x8x8192xf32> to vector<2x8x8192xf32>
    %4 = arith.addf %1, %3 : vector<2x8x8192xf32>
    %c0_4 = arith.constant 0 : index
    %c0_5 = arith.constant 0 : index
    %c0_6 = arith.constant 0 : index
    %5 = vector.load %arg5[%c0_4, %c0_5, %c0_6] : memref<2x8x8192xf32, #tpu.memory_space<vmem>>, vector<2x8x8192xf32>
    tpu.vector_store %arg5[%c0_4, %c0_5, %c0_6], %4 {strides = array<i32>} : memref<2x8x8192xf32, #tpu.memory_space<vmem>>, vector<2x8x8192xf32>,
    return
  }
  func.func @transform_0(%arg0: i32, %arg1: i32, %arg2: i32) -> (i32, i32, i32) {
    %c0_i32 = arith.constant 0 : i32
    return %arg2, %arg0, %arg1 : i32, i32, i32
  }
  func.func @transform_1(%arg0: i32, %arg1: i32, %arg2: i32) -> (i32, i32) {
    %c0_i32 = arith.constant 0 : i32
    %c0_i32_0 = arith.constant 0 : i32
    %c0_i32_1 = arith.constant 0 : i32
    return %c0_i32, %c0_i32_0 : i32, i32
  }
  func.func @transform_2(%arg0: i32, %arg1: i32, %arg2: i32) -> (i32, i32, i32) {
    %c0_i32 = arith.constant 0 : i32
    return %arg2, %arg0, %arg1 : i32, i32, i32
  }
}

</mosaic_0001>

<llo_original>
// kernel: tpu_custom_call.1
$region0: #{tpu_custom_call.1}
  #allocation0 [shape = 'u32[]', space=smem, size = 0x4, offset = 0x4, fixed_abs, tag = 'smem constant byte address 0x4 - core index']
  #allocation1 [shape = 'u32[144,128]{1,0:T(1,128)}', space=vmem, size = 0x12000, scoped, tag = 'internal scratch']
  %s0 = inlined_call_operand.hbm [shape: f32[4,8,8192], index: 0, kind: input, shape index: {}]
  %s1 = inlined_call_operand.hbm [shape: f32[8,8192], index: 1, kind: input, shape index: {}]
  %s2 = inlined_call_operand.hbm [shape: f32[4,8,8192], index: 2, kind: output, shape index: {}]
  %s3 = sld [smem:[#allocation0]]
  $region49: #{tpu_custom_call.1} parent=0
    _
  %s5 = ssub.s32 1, %s3
  %s6 = scalar_select 0, %s5, %s3
  $region1: #{tpu_custom_call.1} parent=0
    #allocation2 [shape = 'u8[1048576]{0}', space=vmem, size = 0x100000, scoped, tag = 'input window, operand 0']
    #allocation3 [shape = 's32[2]{0}', space=sflag, size = 0x8, scoped, tag = 'scoped memory for tpu_custom_call.1']
    #allocation4 [shape = 's32[2]{0}', space=sflag, size = 0x8, scoped, tag = 'scoped memory for tpu_custom_call.1']
    #allocation5 [shape = 'u8[262144]{0}', space=vmem, size = 0x40000, scoped, tag = 'input window, operand 1, single buffered']
    #allocation6 [shape = 's32[1]{0}', space=sflag, size = 0x4, scoped, tag = 'scoped memory for tpu_custom_call.1']
    #allocation7 [shape = 'u8[1048576]{0}', space=vmem, size = 0x100000, scoped, tag = 'output window, operand 0']
    %7 = vsyncpa [#allocation3], 0
    %s8 = scalar_lea.sflag [#allocation3], 1
    %9 = vsyncpa %s8, 0
    %10 = vsyncpa [#allocation6], 0
    %11 = vsyncpa [#allocation4], 0
    %s12 = scalar_lea.sflag [#allocation4], 1
    %13 = vsyncpa %s12, 0
    loop: start=0, step=1, limit=4
    $region2: #{tpu_custom_call.1} parent=1 // loop_pre_header
      _
    $region3: #{tpu_custom_call.1} parent=1 // loop_header
      %s15 = sphi 0, %s19
      %p16 = scmp.ge.s32.totalorder %s15, 4
      %s22 = sphi 0, %s41
      %s23 = sphi 0, %s37
      %s24 = sphi 0, %s33
      %s25 = sphi 0, %s22
      %s26 = sphi 0, %s23
      %s27 = sphi 0, %s24
      %s28 = sphi 0, %s25
      %s29 = sphi 0, %s26
      %s30 = sphi 0, %s27
      %s48 = sphi 0, %s50
      %s51 = sphi 0, %s48
      %s52 = sphi 0, %s51
      %s68 = sphi 0, %s52
      %s72 = sphi 0, %s72
      %s74 = sphi 0, %s72
      %s75 = sphi 0, %s74
      %s89 = sphi 0, %s75
      %s99 = sphi 0, %s101
      %s102 = sphi 0, %s99
      %s103 = sphi 0, %s102
      %s119 = sphi 0, %s103
    $region4: #{tpu_custom_call.1} parent=1 // loop_header_branch
      %18 = sbr.rel (%p16) target = $region8
    $region5: #{tpu_custom_call.1} parent=1 // loop_body
      %s20 = ssub.s32 %s15, 1
      %s21 = ssub.s32 %s15, 2
      %s31 = sadd.s32 1, %s24
      %p32 = scmp.ge.s32.totalorder %s31, 2
      %s33 = scalar_select %p32, 0, %s31
      %s34 = sadd.s32 1, %s23
      %s35 = scalar_select %p32, %s34, %s23
      %p36 = scmp.ge.s32.totalorder %s35, 1
      %s37 = scalar_select %p36, 0, %s35
      %s38 = sadd.s32 1, %s22
      %s39 = scalar_select %p36, %s38, %s22
      %p40 = scmp.ge.s32.totalorder %s39, 1
      %s41 = scalar_select %p40, 0, %s39
      %s42 = ssub.s32 %s24, %s33
      %s43 = ssub.s32 %s22, %s41
      %s44 = sor.u32 %s42, %s43
      %s45 = ssub.s32 %s23, %s37
      %s46 = sor.u32 %s44, %s45
      %p47 = scmp.eq.s32.totalorder %s46, 0
      %s49 = sadd.s32 %s48, 1
      %s50 = scalar_select %p47, %s48, %s49
      %p53 = pneg %p47
      %p54 = scmp.eq.s32.totalorder %s15, 1
      %p55 = por %p53, %p54
      %p56 = scmp.ne.s32.totalorder %s48, %s51
      %p57 = scmp.eq.s32.totalorder %s15, 0
      %p58 = por %p56, %p57
      %p59 = scmp.ne.s32.totalorder %s48, %s51
      %p60 = scmp.eq.s32.totalorder %s20, 1
      %p61 = por %p59, %p60
      %p62 = scmp.ne.s32.totalorder %s51, %s52
      %p63 = scmp.eq.s32.totalorder %s20, 0
      %p64 = por %p62, %p63
      %p65 = scmp.ne.s32.totalorder %s51, %s52
      %p66 = scmp.eq.s32.totalorder %s21, 1
      %p67 = por %p65, %p66
      %p69 = scmp.ne.s32.totalorder %s52, %s68
      %p70 = scmp.eq.s32.totalorder %s21, 0
      %p71 = por %p69, %p70
      %s73 = sadd.s32 %s72, 1
      %p76 = scmp.eq.s32.totalorder %s15, 1
      %p77 = scmp.ne.s32.totalorder %s72, %s74
      %p78 = scmp.eq.s32.totalorder %s15, 0
      %p79 = por %p77, %p78
      %p80 = scmp.ne.s32.totalorder %s72, %s74
      %p81 = scmp.eq.s32.totalorder %s20, 1
      %p82 = por %p80, %p81
      %p83 = scmp.ne.s32.totalorder %s74, %s75
      %p84 = scmp.eq.s32.totalorder %s20, 0
      %p85 = por %p83, %p84
      %p86 = scmp.ne.s32.totalorder %s74, %s75
      %p87 = scmp.eq.s32.totalorder %s21, 1
      %p88 = por %p86, %p87
      %p90 = scmp.ne.s32.totalorder %s75, %s89
      %p91 = scmp.eq.s32.totalorder %s21, 0
      %p92 = por %p90, %p91
      %s93 = ssub.s32 %s24, %s33
      %s94 = ssub.s32 %s22, %s41
      %s95 = sor.u32 %s93, %s94
      %s96 = ssub.s32 %s23, %s37
      %s97 = sor.u32 %s95, %s96
      %p98 = scmp.eq.s32.totalorder %s97, 0
      %s100 = sadd.s32 %s99, 1
      %s101 = scalar_select %p98, %s99, %s100
      %p104 = pneg %p98
      %p105 = scmp.eq.s32.totalorder %s15, 1
      %p106 = por %p104, %p105
      %p107 = scmp.ne.s32.totalorder %s99, %s102
      %p108 = scmp.eq.s32.totalorder %s15, 0
      %p109 = por %p107, %p108
      %p110 = scmp.ne.s32.totalorder %s99, %s102
      %p111 = scmp.eq.s32.totalorder %s20, 1
      %p112 = por %p110, %p111
      %p113 = scmp.ne.s32.totalorder %s102, %s103
      %p114 = scmp.eq.s32.totalorder %s20, 0
      %p115 = por %p113, %p114
      %p116 = scmp.ne.s32.totalorder %s102, %s103
      %p117 = scmp.eq.s32.totalorder %s21, 1
      %p118 = por %p116, %p117
      %p120 = scmp.ne.s32.totalorder %s103, %s119
      %p121 = scmp.eq.s32.totalorder %s21, 0
      %p122 = por %p120, %p121
      %p123 = scmp.le.s32.totalorder 1, %s15
      %p124 = scmp.lt.s32.totalorder %s15, 3
      %p125 = pnand %p123, %p124
      %p126 = pneg %p125
      // Predicated region
      $region9: #{tpu_custom_call.1} parent=5 // pred_check
        _
      $region10: #{tpu_custom_call.1} parent=5 // pred_check_branch
        %128 = sbr.rel (%p125) target = $region12
      $region11: #{tpu_custom_call.1} parent=5 // pred_region
        %s129 = ssub.s32 %s15, 1
        // Predicated region
        $region13: #{tpu_custom_call.1} parent=11 // pred_check
          %p130 = pneg %p85
        $region14: #{tpu_custom_call.1} parent=11 // pred_check_branch
          %132 = sbr.rel (%p130) target = $region16
        $region15: #{tpu_custom_call.1} parent=11 // pred_region
          %s134 = ssub.s32 8192, 8192
          %135 = vsyncadd [#allocation6], %s134
          %s137 = sshll.u32 [#allocation5], 4
          %s138 = int_to_ptr.vmem [resolvable:$true] %s137
          %140 = dma.hbm_to_vmem [thread:$0]  %s1, 8192, %s138, [#allocation6]
        $region16: #{tpu_custom_call.1} parent=11 // pred_fallthru
          _
      $region12: #{tpu_custom_call.1} parent=5 // pred_fallthru
        _
      %p141 = scmp.lt.s32.totalorder %s15, 2
      // Predicated region
      $region17: #{tpu_custom_call.1} parent=5 // pred_check
        %p142 = pneg %p141
      $region18: #{tpu_custom_call.1} parent=5 // pred_check_branch
        %144 = sbr.rel (%p142) target = $region20
      $region19: #{tpu_custom_call.1} parent=5 // pred_region
        // Predicated region
        $region21: #{tpu_custom_call.1} parent=19 // pred_check
          %p145 = pneg %p58
        $region22: #{tpu_custom_call.1} parent=19 // pred_check_branch
          %147 = sbr.rel (%p145) target = $region24
        $region23: #{tpu_custom_call.1} parent=19 // pred_region
          %s148 = sand.u32 %s48, 1
          %s149 = scalar_lea.sflag [#allocation3], %s148
          %s150 = sand.u32 %s48, 1
          %s151 = smul.addr %s150, 1024
          %s152 = scalar_lea.vmem [#allocation2], %s151
          %s153 = smul.u32 2, %s24
          %s154 = smul.u32 64, %s23
          %s156 = ssub.s32 16384, 16384
          %157 = vsyncadd %s149, %s156
          %s158 = smul.addr %s22, 64
          %s159 = sadd.s32 %s154, %s158
          %s160 = smul.addr %s153, 64
          %s161 = sadd.s32 %s159, %s160
          %s162 = smul.addr %s161, 128
          %s163 = scalar_lea.hbm %s0, %s162
          %s164 = sshll.u32 %s152, 4
          %s165 = int_to_ptr.vmem [resolvable:$true] %s164
          %170 = dma.hbm_to_vmem [thread:$0]  %s163, 16384, %s165, %s149, 8192, 8192, 512
        $region24: #{tpu_custom_call.1} parent=19 // pred_fallthru
          _
      $region20: #{tpu_custom_call.1} parent=5 // pred_fallthru
        _
      %p171 = scmp.le.s32.totalorder 1, %s15
      %p172 = scmp.lt.s32.totalorder %s15, 3
      %p173 = pnand %p171, %p172
      %p174 = pneg %p173
      // Predicated region
      $region25: #{tpu_custom_call.1} parent=5 // pred_check
        _
      $region26: #{tpu_custom_call.1} parent=5 // pred_check_branch
        %176 = sbr.rel (%p173) target = $region28
      $region27: #{tpu_custom_call.1} parent=5 // pred_region
        %s177 = ssub.s32 %s15, 1
        %s178 = sand.u32 %s51, 1
        %s179 = scalar_lea.sflag [#allocation3], %s178
        %s180 = sand.u32 %s51, 1
        %s181 = smul.addr %s180, 1024
        %s182 = scalar_lea.vmem [#allocation2], %s181
        // Predicated region
        $region29: #{tpu_custom_call.1} parent=27 // pred_check
          %p183 = pneg %p64
        $region30: #{tpu_custom_call.1} parent=27 // pred_check_branch
          %185 = sbr.rel (%p183) target = $region32
        $region31: #{tpu_custom_call.1} parent=27 // pred_region
          %186 = dma.done %s179, 16384
        $region32: #{tpu_custom_call.1} parent=27 // pred_fallthru
          _
        // Predicated region
        $region33: #{tpu_custom_call.1} parent=27 // pred_check
          %p187 = pneg %p85
        $region34: #{tpu_custom_call.1} parent=27 // pred_check_branch
          %189 = sbr.rel (%p187) target = $region36
        $region35: #{tpu_custom_call.1} parent=27 // pred_region
          %190 = dma.done [#allocation6], 8192
        $region36: #{tpu_custom_call.1} parent=27 // pred_fallthru
          _
        %s191 = sand.u32 %s51, 1
        %s192 = scalar_lea.sflag [#allocation3], %s191
        %s193 = sand.u32 %s51, 1
        %s194 = smul.addr %s193, 1024
        %s195 = scalar_lea.vmem [#allocation2], %s194
        %p196 = pneg %p64
        %p197 = pneg %p61
        %p198 = pneg %p85
        %p199 = pneg %p82
        %p200 = pneg %p115
        %p201 = pneg %p112
        %s202 = sand.u32 %s102, 1
        %s203 = scalar_lea.sflag [#allocation4], %s202
        %s204 = sand.u32 %s102, 1
        %s205 = smul.addr %s204, 1024
        %s206 = scalar_lea.vmem [#allocation7], %s205
        %s207 = smul.u32 2, %s27
        %s208 = smul.u32 64, %s26
        %s209 = smul.u32 2, %s27
        %s210 = smul.u32 64, %s26
        %v211 = vld [vmem:[#allocation5] sm:$0xff]
        %v212 = vld [vmem:[#allocation5 + $0x8] sm:$0xff]
        %v213 = vld [vmem:[#allocation5 + $0x10] sm:$0xff]
        %v214 = vld [vmem:[#allocation5 + $0x18] sm:$0xff]
        %v215 = vld [vmem:[#allocation5 + $0x20] sm:$0xff]
        %v216 = vld [vmem:[#allocation5 + $0x28] sm:$0xff]
        %v217 = vld [vmem:[#allocation5 + $0x30] sm:$0xff]
        %v218 = vld [vmem:[#allocation5 + $0x38] sm:$0xff]
        %v219 = vld [vmem:[#allocation5 + $0x40] sm:$0xff]
        %v220 = vld [vmem:[#allocation5 + $0x48] sm:$0xff]
        %v221 = vld [vmem:[#allocation5 + $0x50] sm:$0xff]
        %v222 = vld [vmem:[#allocation5 + $0x58] sm:$0xff]
        %v223 = vld [vmem:[#allocation5 + $0x60] sm:$0xff]
        %v224 = vld [vmem:[#allocation5 + $0x68] sm:$0xff]
        %v225 = vld [vmem:[#allocation5 + $0x70] sm:$0xff]
        %v226 = vld [vmem:[#allocation5 + $0x78] sm:$0xff]
        %v227 = vld [vmem:[#allocation5 + $0x80] sm:$0xff]
        %v228 = vld [vmem:[#allocation5 + $0x88] sm:$0xff]
        %v229 = vld [vmem:[#allocation5 + $0x90] sm:$0xff]
        %v230 = vld [vmem:[#allocation5 + $0x98] sm:$0xff]
        %v231 = vld [vmem:[#allocation5 + $0xa0] sm:$0xff]
        %v232 = vld [vmem:[#allocation5 + $0xa8] sm:$0xff]
        %v233 = vld [vmem:[#allocation5 + $0xb0] sm:$0xff]
        %v234 = vld [vmem:[#allocation5 + $0xb8] sm:$0xff]
        %v235 = vld [vmem:[#allocation5 + $0xc0] sm:$0xff]
        %v236 = vld [vmem:[#allocation5 + $0xc8] sm:$0xff]
        %v237 = vld [vmem:[#allocation5 + $0xd0] sm:$0xff]
        %v238 = vld [vmem:[#allocation5 + $0xd8] sm:$0xff]
        %v239 = vld [vmem:[#allocation5 + $0xe0] sm:$0xff]
        %v240 = vld [vmem:[#allocation5 + $0xe8] sm:$0xff]
        %v241 = vld [vmem:[#allocation5 + $0xf0] sm:$0xff]
        %v242 = vld [vmem:[#allocation5 + $0xf8] sm:$0xff]
        %v243 = vld [vmem:[#allocation5 + $0x100] sm:$0xff]
        %v244 = vld [vmem:[#allocation5 + $0x108] sm:$0xff]
        %v245 = vld [vmem:[#allocation5 + $0x110] sm:$0xff]
        %v246 = vld [vmem:[#allocation5 + $0x118] sm:$0xff]
        %v247 = vld [vmem:[#allocation5 + $0x120] sm:$0xff]
        %v248 = vld [vmem:[#allocation5 + $0x128] sm:$0xff]
        %v249 = vld [vmem:[#allocation5 + $0x130] sm:$0xff]
        %v250 = vld [vmem:[#allocation5 + $0x138] sm:$0xff]
        %v251 = vld [vmem:[#allocation5 + $0x140] sm:$0xff]
        %v252 = vld [vmem:[#allocation5 + $0x148] sm:$0xff]
        %v253 = vld [vmem:[#allocation5 + $0x150] sm:$0xff]
        %v254 = vld [vmem:[#allocation5 + $0x158] sm:$0xff]
        %v255 = vld [vmem:[#allocation5 + $0x160] sm:$0xff]
        %v256 = vld [vmem:[#allocation5 + $0x168] sm:$0xff]
        %v257 = vld [vmem:[#allocation5 + $0x170] sm:$0xff]
        %v258 = vld [vmem:[#allocation5 + $0x178] sm:$0xff]
        %v259 = vld [vmem:[#allocation5 + $0x180] sm:$0xff]
        %v260 = vld [vmem:[#allocation5 + $0x188] sm:$0xff]
        %v261 = vld [vmem:[#allocation5 + $0x190] sm:$0xff]
        %v262 = vld [vmem:[#allocation5 + $0x198] sm:$0xff]
        %v263 = vld [vmem:[#allocation5 + $0x1a0] sm:$0xff]
        %v264 = vld [vmem:[#allocation5 + $0x1a8] sm:$0xff]
        %v265 = vld [vmem:[#allocation5 + $0x1b0] sm:$0xff]
        %v266 = vld [vmem:[#allocation5 + $0x1b8] sm:$0xff]
        %v267 = vld [vmem:[#allocation5 + $0x1c0] sm:$0xff]
        %v268 = vld [vmem:[#allocation5 + $0x1c8] sm:$0xff]
        %v269 = vld [vmem:[#allocation5 + $0x1d0] sm:$0xff]
        %v270 = vld [vmem:[#allocation5 + $0x1d8] sm:$0xff]
        %v271 = vld [vmem:[#allocation5 + $0x1e0] sm:$0xff]
        %v272 = vld [vmem:[#allocation5 + $0x1e8] sm:$0xff]
        %v273 = vld [vmem:[#allocation5 + $0x1f0] sm:$0xff]
        %v274 = vld [vmem:[#allocation5 + $0x1f8] sm:$0xff]
        %v275 = vld [vmem:[%s182] sm:$0xff]
        %v276 = vld [vmem:[%s182 + $0x8] sm:$0xff]
        %v277 = vld [vmem:[%s182 + $0x10] sm:$0xff]
        %v278 = vld [vmem:[%s182 + $0x18] sm:$0xff]
        %v279 = vld [vmem:[%s182 + $0x20] sm:$0xff]
        %v280 = vld [vmem:[%s182 + $0x28] sm:$0xff]
        %v281 = vld [vmem:[%s182 + $0x30] sm:$0xff]
        %v282 = vld [vmem:[%s182 + $0x38] sm:$0xff]
        %v283 = vld [vmem:[%s182 + $0x40] sm:$0xff]
        %v284 = vld [vmem:[%s182 + $0x48] sm:$0xff]
        %v285 = vld [vmem:[%s182 + $0x50] sm:$0xff]
        %v286 = vld [vmem:[%s182 + $0x58] sm:$0xff]
        %v287 = vld [vmem:[%s182 + $0x60] sm:$0xff]
        %v288 = vld [vmem:[%s182 + $0x68] sm:$0xff]
        %v289 = vld [vmem:[%s182 + $0x70] sm:$0xff]
        %v290 = vld [vmem:[%s182 + $0x78] sm:$0xff]
        %v291 = vld [vmem:[%s182 + $0x80] sm:$0xff]
        %v292 = vld [vmem:[%s182 + $0x88] sm:$0xff]
        %v293 = vld [vmem:[%s182 + $0x90] sm:$0xff]
        %v294 = vld [vmem:[%s182 + $0x98] sm:$0xff]
        %v295 = vld [vmem:[%s182 + $0xa0] sm:$0xff]
        %v296 = vld [vmem:[%s182 + $0xa8] sm:$0xff]
        %v297 = vld [vmem:[%s182 + $0xb0] sm:$0xff]
        %v298 = vld [vmem:[%s182 + $0xb8] sm:$0xff]
        %v299 = vld [vmem:[%s182 + $0xc0] sm:$0xff]
        %v300 = vld [vmem:[%s182 + $0xc8] sm:$0xff]
        %v301 = vld [vmem:[%s182 + $0xd0] sm:$0xff]
        %v302 = vld [vmem:[%s182 + $0xd8] sm:$0xff]
        %v303 = vld [vmem:[%s182 + $0xe0] sm:$0xff]
        %v304 = vld [vmem:[%s182 + $0xe8] sm:$0xff]
        %v305 = vld [vmem:[%s182 + $0xf0] sm:$0xff]
        %v306 = vld [vmem:[%s182 + $0xf8] sm:$0xff]
        %v307 = vld [vmem:[%s182 + $0x100] sm:$0xff]
        %v308 = vld [vmem:[%s182 + $0x108] sm:$0xff]
        %v309 = vld [vmem:[%s182 + $0x110] sm:$0xff]
        %v310 = vld [vmem:[%s182 + $0x118] sm:$0xff]
        %v311 = vld [vmem:[%s182 + $0x120] sm:$0xff]
        %v312 = vld [vmem:[%s182 + $0x128] sm:$0xff]
        %v313 = vld [vmem:[%s182 + $0x130] sm:$0xff]
        %v314 = vld [vmem:[%s182 + $0x138] sm:$0xff]
        %v315 = vld [vmem:[%s182 + $0x140] sm:$0xff]
        %v316 = vld [vmem:[%s182 + $0x148] sm:$0xff]
        %v317 = vld [vmem:[%s182 + $0x150] sm:$0xff]
        %v318 = vld [vmem:[%s182 + $0x158] sm:$0xff]
        %v319 = vld [vmem:[%s182 + $0x160] sm:$0xff]
        %v320 = vld [vmem:[%s182 + $0x168] sm:$0xff]
        %v321 = vld [vmem:[%s182 + $0x170] sm:$0xff]
        %v322 = vld [vmem:[%s182 + $0x178] sm:$0xff]
        %v323 = vld [vmem:[%s182 + $0x180] sm:$0xff]
        %v324 = vld [vmem:[%s182 + $0x188] sm:$0xff]
        %v325 = vld [vmem:[%s182 + $0x190] sm:$0xff]
        %v326 = vld [vmem:[%s182 + $0x198] sm:$0xff]
        %v327 = vld [vmem:[%s182 + $0x1a0] sm:$0xff]
        %v328 = vld [vmem:[%s182 + $0x1a8] sm:$0xff]
        %v329 = vld [vmem:[%s182 + $0x1b0] sm:$0xff]
        %v330 = vld [vmem:[%s182 + $0x1b8] sm:$0xff]
        %v331 = vld [vmem:[%s182 + $0x1c0] sm:$0xff]
        %v332 = vld [vmem:[%s182 + $0x1c8] sm:$0xff]
        %v333 = vld [vmem:[%s182 + $0x1d0] sm:$0xff]
        %v334 = vld [vmem:[%s182 + $0x1d8] sm:$0xff]
        %v335 = vld [vmem:[%s182 + $0x1e0] sm:$0xff]
        %v336 = vld [vmem:[%s182 + $0x1e8] sm:$0xff]
        %v337 = vld [vmem:[%s182 + $0x1f0] sm:$0xff]
        %v338 = vld [vmem:[%s182 + $0x1f8] sm:$0xff]
        %v339 = vld [vmem:[%s182 + $0x200] sm:$0xff]
        %v340 = vld [vmem:[%s182 + $0x208] sm:$0xff]
        %v341 = vld [vmem:[%s182 + $0x210] sm:$0xff]
        %v342 = vld [vmem:[%s182 + $0x218] sm:$0xff]
        %v343 = vld [vmem:[%s182 + $0x220] sm:$0xff]
        %v344 = vld [vmem:[%s182 + $0x228] sm:$0xff]
        %v345 = vld [vmem:[%s182 + $0x230] sm:$0xff]
        %v346 = vld [vmem:[%s182 + $0x238] sm:$0xff]
        %v347 = vld [vmem:[%s182 + $0x240] sm:$0xff]
        %v348 = vld [vmem:[%s182 + $0x248] sm:$0xff]
        %v349 = vld [vmem:[%s182 + $0x250] sm:$0xff]
        %v350 = vld [vmem:[%s182 + $0x258] sm:$0xff]
        %v351 = vld [vmem:[%s182 + $0x260] sm:$0xff]
        %v352 = vld [vmem:[%s182 + $0x268] sm:$0xff]
        %v353 = vld [vmem:[%s182 + $0x270] sm:$0xff]
        %v354 = vld [vmem:[%s182 + $0x278] sm:$0xff]
        %v355 = vld [vmem:[%s182 + $0x280] sm:$0xff]
        %v356 = vld [vmem:[%s182 + $0x288] sm:$0xff]
        %v357 = vld [vmem:[%s182 + $0x290] sm:$0xff]
        %v358 = vld [vmem:[%s182 + $0x298] sm:$0xff]
        %v359 = vld [vmem:[%s182 + $0x2a0] sm:$0xff]
        %v360 = vld [vmem:[%s182 + $0x2a8] sm:$0xff]
        %v361 = vld [vmem:[%s182 + $0x2b0] sm:$0xff]
        %v362 = vld [vmem:[%s182 + $0x2b8] sm:$0xff]
        %v363 = vld [vmem:[%s182 + $0x2c0] sm:$0xff]
        %v364 = vld [vmem:[%s182 + $0x2c8] sm:$0xff]
        %v365 = vld [vmem:[%s182 + $0x2d0] sm:$0xff]
        %v366 = vld [vmem:[%s182 + $0x2d8] sm:$0xff]
        %v367 = vld [vmem:[%s182 + $0x2e0] sm:$0xff]
        %v368 = vld [vmem:[%s182 + $0x2e8] sm:$0xff]
        %v369 = vld [vmem:[%s182 + $0x2f0] sm:$0xff]
        %v370 = vld [vmem:[%s182 + $0x2f8] sm:$0xff]
        %v371 = vld [vmem:[%s182 + $0x300] sm:$0xff]
        %v372 = vld [vmem:[%s182 + $0x308] sm:$0xff]
        %v373 = vld [vmem:[%s182 + $0x310] sm:$0xff]
        %v374 = vld [vmem:[%s182 + $0x318] sm:$0xff]
        %v375 = vld [vmem:[%s182 + $0x320] sm:$0xff]
        %v376 = vld [vmem:[%s182 + $0x328] sm:$0xff]
        %v377 = vld [vmem:[%s182 + $0x330] sm:$0xff]
        %v378 = vld [vmem:[%s182 + $0x338] sm:$0xff]
        %v379 = vld [vmem:[%s182 + $0x340] sm:$0xff]
        %v380 = vld [vmem:[%s182 + $0x348] sm:$0xff]
        %v381 = vld [vmem:[%s182 + $0x350] sm:$0xff]
        %v382 = vld [vmem:[%s182 + $0x358] sm:$0xff]
        %v383 = vld [vmem:[%s182 + $0x360] sm:$0xff]
        %v384 = vld [vmem:[%s182 + $0x368] sm:$0xff]
        %v385 = vld [vmem:[%s182 + $0x370] sm:$0xff]
        %v386 = vld [vmem:[%s182 + $0x378] sm:$0xff]
        %v387 = vld [vmem:[%s182 + $0x380] sm:$0xff]
        %v388 = vld [vmem:[%s182 + $0x388] sm:$0xff]
        %v389 = vld [vmem:[%s182 + $0x390] sm:$0xff]
        %v390 = vld [vmem:[%s182 + $0x398] sm:$0xff]
        %v391 = vld [vmem:[%s182 + $0x3a0] sm:$0xff]
        %v392 = vld [vmem:[%s182 + $0x3a8] sm:$0xff]
        %v393 = vld [vmem:[%s182 + $0x3b0] sm:$0xff]
        %v394 = vld [vmem:[%s182 + $0x3b8] sm:$0xff]
        %v395 = vld [vmem:[%s182 + $0x3c0] sm:$0xff]
        %v396 = vld [vmem:[%s182 + $0x3c8] sm:$0xff]
        %v397 = vld [vmem:[%s182 + $0x3d0] sm:$0xff]
        %v398 = vld [vmem:[%s182 + $0x3d8] sm:$0xff]
        %v399 = vld [vmem:[%s182 + $0x3e0] sm:$0xff]
        %v400 = vld [vmem:[%s182 + $0x3e8] sm:$0xff]
        %v401 = vld [vmem:[%s182 + $0x3f0] sm:$0xff]
        %v402 = vld [vmem:[%s182 + $0x3f8] sm:$0xff]
        %v403 = vadd.f32 %v275, %v211
        %v404 = vadd.f32 %v276, %v212
        %v405 = vadd.f32 %v277, %v213
        %v406 = vadd.f32 %v278, %v214
        %v407 = vadd.f32 %v279, %v215
        %v408 = vadd.f32 %v280, %v216
        %v409 = vadd.f32 %v281, %v217
        %v410 = vadd.f32 %v282, %v218
        %v411 = vadd.f32 %v283, %v219
        %v412 = vadd.f32 %v284, %v220
        %v413 = vadd.f32 %v285, %v221
        %v414 = vadd.f32 %v286, %v222
        %v415 = vadd.f32 %v287, %v223
        %v416 = vadd.f32 %v288, %v224
        %v417 = vadd.f32 %v289, %v225
        %v418 = vadd.f32 %v290, %v226
        %v419 = vadd.f32 %v291, %v227
        %v420 = vadd.f32 %v292, %v228
        %v421 = vadd.f32 %v293, %v229
        %v422 = vadd.f32 %v294, %v230
        %v423 = vadd.f32 %v295, %v231
        %v424 = vadd.f32 %v296, %v232
        %v425 = vadd.f32 %v297, %v233
        %v426 = vadd.f32 %v298, %v234
        %v427 = vadd.f32 %v299, %v235
        %v428 = vadd.f32 %v300, %v236
        %v429 = vadd.f32 %v301, %v237
        %v430 = vadd.f32 %v302, %v238
        %v431 = vadd.f32 %v303, %v239
        %v432 = vadd.f32 %v304, %v240
        %v433 = vadd.f32 %v305, %v241
        %v434 = vadd.f32 %v306, %v242
        %v435 = vadd.f32 %v307, %v243
        %v436 = vadd.f32 %v308, %v244
        %v437 = vadd.f32 %v309, %v245
        %v438 = vadd.f32 %v310, %v246
        %v439 = vadd.f32 %v311, %v247
        %v440 = vadd.f32 %v312, %v248
        %v441 = vadd.f32 %v313, %v249
        %v442 = vadd.f32 %v314, %v250
        %v443 = vadd.f32 %v315, %v251
        %v444 = vadd.f32 %v316, %v252
        %v445 = vadd.f32 %v317, %v253
        %v446 = vadd.f32 %v318, %v254
        %v447 = vadd.f32 %v319, %v255
        %v448 = vadd.f32 %v320, %v256
        %v449 = vadd.f32 %v321, %v257
        %v450 = vadd.f32 %v322, %v258
        %v451 = vadd.f32 %v323, %v259
        %v452 = vadd.f32 %v324, %v260
        %v453 = vadd.f32 %v325, %v261
        %v454 = vadd.f32 %v326, %v262
        %v455 = vadd.f32 %v327, %v263
        %v456 = vadd.f32 %v328, %v264
        %v457 = vadd.f32 %v329, %v265
        %v458 = vadd.f32 %v330, %v266
        %v459 = vadd.f32 %v331, %v267
        %v460 = vadd.f32 %v332, %v268
        %v461 = vadd.f32 %v333, %v269
        %v462 = vadd.f32 %v334, %v270
        %v463 = vadd.f32 %v335, %v271
        %v464 = vadd.f32 %v336, %v272
        %v465 = vadd.f32 %v337, %v273
        %v466 = vadd.f32 %v338, %v274
        %v467 = vadd.f32 %v339, %v211
        %v468 = vadd.f32 %v340, %v212
        %v469 = vadd.f32 %v341, %v213
        %v470 = vadd.f32 %v342, %v214
        %v471 = vadd.f32 %v343, %v215
        %v472 = vadd.f32 %v344, %v216
        %v473 = vadd.f32 %v345, %v217
        %v474 = vadd.f32 %v346, %v218
        %v475 = vadd.f32 %v347, %v219
        %v476 = vadd.f32 %v348, %v220
        %v477 = vadd.f32 %v349, %v221
        %v478 = vadd.f32 %v350, %v222
        %v479 = vadd.f32 %v351, %v223
        %v480 = vadd.f32 %v352, %v224
        %v481 = vadd.f32 %v353, %v225
        %v482 = vadd.f32 %v354, %v226
        %v483 = vadd.f32 %v355, %v227
        %v484 = vadd.f32 %v356, %v228
        %v485 = vadd.f32 %v357, %v229
        %v486 = vadd.f32 %v358, %v230
        %v487 = vadd.f32 %v359, %v231
        %v488 = vadd.f32 %v360, %v232
        %v489 = vadd.f32 %v361, %v233
        %v490 = vadd.f32 %v362, %v234
        %v491 = vadd.f32 %v363, %v235
        %v492 = vadd.f32 %v364, %v236
        %v493 = vadd.f32 %v365, %v237
        %v494 = vadd.f32 %v366, %v238
        %v495 = vadd.f32 %v367, %v239
        %v496 = vadd.f32 %v368, %v240
        %v497 = vadd.f32 %v369, %v241
        %v498 = vadd.f32 %v370, %v242
        %v499 = vadd.f32 %v371, %v243
        %v500 = vadd.f32 %v372, %v244
        %v501 = vadd.f32 %v373, %v245
        %v502 = vadd.f32 %v374, %v246
        %v503 = vadd.f32 %v375, %v247
        %v504 = vadd.f32 %v376, %v248
        %v505 = vadd.f32 %v377, %v249
        %v506 = vadd.f32 %v378, %v250
        %v507 = vadd.f32 %v379, %v251
        %v508 = vadd.f32 %v380, %v252
        %v509 = vadd.f32 %v381, %v253
        %v510 = vadd.f32 %v382, %v254
        %v511 = vadd.f32 %v383, %v255
        %v512 = vadd.f32 %v384, %v256
        %v513 = vadd.f32 %v385, %v257
        %v514 = vadd.f32 %v386, %v258
        %v515 = vadd.f32 %v387, %v259
        %v516 = vadd.f32 %v388, %v260
        %v517 = vadd.f32 %v389, %v261
        %v518 = vadd.f32 %v390, %v262
        %v519 = vadd.f32 %v391, %v263
        %v520 = vadd.f32 %v392, %v264
        %v521 = vadd.f32 %v393, %v265
        %v522 = vadd.f32 %v394, %v266
        %v523 = vadd.f32 %v395, %v267
        %v524 = vadd.f32 %v396, %v268
        %v525 = vadd.f32 %v397, %v269
        %v526 = vadd.f32 %v398, %v270
        %v527 = vadd.f32 %v399, %v271
        %v528 = vadd.f32 %v400, %v272
        %v529 = vadd.f32 %v401, %v273
        %v530 = vadd.f32 %v402, %v274
        %531 = vst [vmem:[%s206] sm:$0xff] %v403
        %532 = vst [vmem:[%s206 + $0x8] sm:$0xff] %v404
        %533 = vst [vmem:[%s206 + $0x10] sm:$0xff] %v405
        %534 = vst [vmem:[%s206 + $0x18] sm:$0xff] %v406
        %535 = vst [vmem:[%s206 + $0x20] sm:$0xff] %v407
        %536 = vst [vmem:[%s206 + $0x28] sm:$0xff] %v408
        %537 = vst [vmem:[%s206 + $0x30] sm:$0xff] %v409
        %538 = vst [vmem:[%s206 + $0x38] sm:$0xff] %v410
        %539 = vst [vmem:[%s206 + $0x40] sm:$0xff] %v411
        %540 = vst [vmem:[%s206 + $0x48] sm:$0xff] %v412
        %541 = vst [vmem:[%s206 + $0x50] sm:$0xff] %v413
        %542 = vst [vmem:[%s206 + $0x58] sm:$0xff] %v414
        %543 = vst [vmem:[%s206 + $0x60] sm:$0xff] %v415
        %544 = vst [vmem:[%s206 + $0x68] sm:$0xff] %v416
        %545 = vst [vmem:[%s206 + $0x70] sm:$0xff] %v417
        %546 = vst [vmem:[%s206 + $0x78] sm:$0xff] %v418
        %547 = vst [vmem:[%s206 + $0x80] sm:$0xff] %v419
        %548 = vst [vmem:[%s206 + $0x88] sm:$0xff] %v420
        %549 = vst [vmem:[%s206 + $0x90] sm:$0xff] %v421
        %550 = vst [vmem:[%s206 + $0x98] sm:$0xff] %v422
        %551 = vst [vmem:[%s206 + $0xa0] sm:$0xff] %v423
        %552 = vst [vmem:[%s206 + $0xa8] sm:$0xff] %v424
        %553 = vst [vmem:[%s206 + $0xb0] sm:$0xff] %v425
        %554 = vst [vmem:[%s206 + $0xb8] sm:$0xff] %v426
        %555 = vst [vmem:[%s206 + $0xc0] sm:$0xff] %v427
        %556 = vst [vmem:[%s206 + $0xc8] sm:$0xff] %v428
        %557 = vst [vmem:[%s206 + $0xd0] sm:$0xff] %v429
        %558 = vst [vmem:[%s206 + $0xd8] sm:$0xff] %v430
        %559 = vst [vmem:[%s206 + $0xe0] sm:$0xff] %v431
        %560 = vst [vmem:[%s206 + $0xe8] sm:$0xff] %v432
        %561 = vst [vmem:[%s206 + $0xf0] sm:$0xff] %v433
        %562 = vst [vmem:[%s206 + $0xf8] sm:$0xff] %v434
        %563 = vst [vmem:[%s206 + $0x100] sm:$0xff] %v435
        %564 = vst [vmem:[%s206 + $0x108] sm:$0xff] %v436
        %565 = vst [vmem:[%s206 + $0x110] sm:$0xff] %v437
        %566 = vst [vmem:[%s206 + $0x118] sm:$0xff] %v438
        %567 = vst [vmem:[%s206 + $0x120] sm:$0xff] %v439
        %568 = vst [vmem:[%s206 + $0x128] sm:$0xff] %v440
        %569 = vst [vmem:[%s206 + $0x130] sm:$0xff] %v441
        %570 = vst [vmem:[%s206 + $0x138] sm:$0xff] %v442
        %571 = vst [vmem:[%s206 + $0x140] sm:$0xff] %v443
        %572 = vst [vmem:[%s206 + $0x148] sm:$0xff] %v444
        %573 = vst [vmem:[%s206 + $0x150] sm:$0xff] %v445
        %574 = vst [vmem:[%s206 + $0x158] sm:$0xff] %v446
        %575 = vst [vmem:[%s206 + $0x160] sm:$0xff] %v447
        %576 = vst [vmem:[%s206 + $0x168] sm:$0xff] %v448
        %577 = vst [vmem:[%s206 + $0x170] sm:$0xff] %v449
        %578 = vst [vmem:[%s206 + $0x178] sm:$0xff] %v450
        %579 = vst [vmem:[%s206 + $0x180] sm:$0xff] %v451
        %580 = vst [vmem:[%s206 + $0x188] sm:$0xff] %v452
        %581 = vst [vmem:[%s206 + $0x190] sm:$0xff] %v453
        %582 = vst [vmem:[%s206 + $0x198] sm:$0xff] %v454
        %583 = vst [vmem:[%s206 + $0x1a0] sm:$0xff] %v455
        %584 = vst [vmem:[%s206 + $0x1a8] sm:$0xff] %v456
        %585 = vst [vmem:[%s206 + $0x1b0] sm:$0xff] %v457
        %586 = vst [vmem:[%s206 + $0x1b8] sm:$0xff] %v458
        %587 = vst [vmem:[%s206 + $0x1c0] sm:$0xff] %v459
        %588 = vst [vmem:[%s206 + $0x1c8] sm:$0xff] %v460
        %589 = vst [vmem:[%s206 + $0x1d0] sm:$0xff] %v461
        %590 = vst [vmem:[%s206 + $0x1d8] sm:$0xff] %v462
        %591 = vst [vmem:[%s206 + $0x1e0] sm:$0xff] %v463
        %592 = vst [vmem:[%s206 + $0x1e8] sm:$0xff] %v464
        %593 = vst [vmem:[%s206 + $0x1f0] sm:$0xff] %v465
        %594 = vst [vmem:[%s206 + $0x1f8] sm:$0xff] %v466
        %595 = vst [vmem:[%s206 + $0x200] sm:$0xff] %v467
        %596 = vst [vmem:[%s206 + $0x208] sm:$0xff] %v468
        %597 = vst [vmem:[%s206 + $0x210] sm:$0xff] %v469
        %598 = vst [vmem:[%s206 + $0x218] sm:$0xff] %v470
        %599 = vst [vmem:[%s206 + $0x220] sm:$0xff] %v471
        %600 = vst [vmem:[%s206 + $0x228] sm:$0xff] %v472
        %601 = vst [vmem:[%s206 + $0x230] sm:$0xff] %v473
        %602 = vst [vmem:[%s206 + $0x238] sm:$0xff] %v474
        %603 = vst [vmem:[%s206 + $0x240] sm:$0xff] %v475
        %604 = vst [vmem:[%s206 + $0x248] sm:$0xff] %v476
        %605 = vst [vmem:[%s206 + $0x250] sm:$0xff] %v477
        %606 = vst [vmem:[%s206 + $0x258] sm:$0xff] %v478
        %607 = vst [vmem:[%s206 + $0x260] sm:$0xff] %v479
        %608 = vst [vmem:[%s206 + $0x268] sm:$0xff] %v480
        %609 = vst [vmem:[%s206 + $0x270] sm:$0xff] %v481
        %610 = vst [vmem:[%s206 + $0x278] sm:$0xff] %v482
        %611 = vst [vmem:[%s206 + $0x280] sm:$0xff] %v483
        %612 = vst [vmem:[%s206 + $0x288] sm:$0xff] %v484
        %613 = vst [vmem:[%s206 + $0x290] sm:$0xff] %v485
        %614 = vst [vmem:[%s206 + $0x298] sm:$0xff] %v486
        %615 = vst [vmem:[%s206 + $0x2a0] sm:$0xff] %v487
        %616 = vst [vmem:[%s206 + $0x2a8] sm:$0xff] %v488
        %617 = vst [vmem:[%s206 + $0x2b0] sm:$0xff] %v489
        %618 = vst [vmem:[%s206 + $0x2b8] sm:$0xff] %v490
        %619 = vst [vmem:[%s206 + $0x2c0] sm:$0xff] %v491
        %620 = vst [vmem:[%s206 + $0x2c8] sm:$0xff] %v492
        %621 = vst [vmem:[%s206 + $0x2d0] sm:$0xff] %v493
        %622 = vst [vmem:[%s206 + $0x2d8] sm:$0xff] %v494
        %623 = vst [vmem:[%s206 + $0x2e0] sm:$0xff] %v495
        %624 = vst [vmem:[%s206 + $0x2e8] sm:$0xff] %v496
        %625 = vst [vmem:[%s206 + $0x2f0] sm:$0xff] %v497
        %626 = vst [vmem:[%s206 + $0x2f8] sm:$0xff] %v498
        %627 = vst [vmem:[%s206 + $0x300] sm:$0xff] %v499
        %628 = vst [vmem:[%s206 + $0x308] sm:$0xff] %v500
        %629 = vst [vmem:[%s206 + $0x310] sm:$0xff] %v501
        %630 = vst [vmem:[%s206 + $0x318] sm:$0xff] %v502
        %631 = vst [vmem:[%s206 + $0x320] sm:$0xff] %v503
        %632 = vst [vmem:[%s206 + $0x328] sm:$0xff] %v504
        %633 = vst [vmem:[%s206 + $0x330] sm:$0xff] %v505
        %634 = vst [vmem:[%s206 + $0x338] sm:$0xff] %v506
        %635 = vst [vmem:[%s206 + $0x340] sm:$0xff] %v507
        %636 = vst [vmem:[%s206 + $0x348] sm:$0xff] %v508
        %637 = vst [vmem:[%s206 + $0x350] sm:$0xff] %v509
        %638 = vst [vmem:[%s206 + $0x358] sm:$0xff] %v510
        %639 = vst [vmem:[%s206 + $0x360] sm:$0xff] %v511
        %640 = vst [vmem:[%s206 + $0x368] sm:$0xff] %v512
        %641 = vst [vmem:[%s206 + $0x370] sm:$0xff] %v513
        %642 = vst [vmem:[%s206 + $0x378] sm:$0xff] %v514
        %643 = vst [vmem:[%s206 + $0x380] sm:$0xff] %v515
        %644 = vst [vmem:[%s206 + $0x388] sm:$0xff] %v516
        %645 = vst [vmem:[%s206 + $0x390] sm:$0xff] %v517
        %646 = vst [vmem:[%s206 + $0x398] sm:$0xff] %v518
        %647 = vst [vmem:[%s206 + $0x3a0] sm:$0xff] %v519
        %648 = vst [vmem:[%s206 + $0x3a8] sm:$0xff] %v520
        %649 = vst [vmem:[%s206 + $0x3b0] sm:$0xff] %v521
        %650 = vst [vmem:[%s206 + $0x3b8] sm:$0xff] %v522
        %651 = vst [vmem:[%s206 + $0x3c0] sm:$0xff] %v523
        %652 = vst [vmem:[%s206 + $0x3c8] sm:$0xff] %v524
        %653 = vst [vmem:[%s206 + $0x3d0] sm:$0xff] %v525
        %654 = vst [vmem:[%s206 + $0x3d8] sm:$0xff] %v526
        %655 = vst [vmem:[%s206 + $0x3e0] sm:$0xff] %v527
        %656 = vst [vmem:[%s206 + $0x3e8] sm:$0xff] %v528
        %657 = vst [vmem:[%s206 + $0x3f0] sm:$0xff] %v529
        %658 = vst [vmem:[%s206 + $0x3f8] sm:$0xff] %v530
        %s659 = sand.u32 %s102, 1
        %s660 = scalar_lea.sflag [#allocation4], %s659
        %s661 = sand.u32 %s102, 1
        %s662 = smul.addr %s661, 1024
        %s663 = scalar_lea.vmem [#allocation7], %s662
        // Predicated region
        $region37: #{tpu_custom_call.1} parent=27 // pred_check
          %p664 = pneg %p112
        $region38: #{tpu_custom_call.1} parent=27 // pred_check_branch
          %666 = sbr.rel (%p664) target = $region40
        $region39: #{tpu_custom_call.1} parent=27 // pred_region
          %s667 = smul.u32 2, %s27
          %s668 = smul.u32 64, %s26
          %s670 = ssub.s32 16384, 16384
          %671 = vsyncadd %s660, %s670
          %s672 = smul.addr %s25, 64
          %s673 = sadd.s32 %s668, %s672
          %s674 = smul.addr %s667, 64
          %s675 = sadd.s32 %s673, %s674
          %s676 = smul.addr %s675, 128
          %s677 = scalar_lea.hbm %s2, %s676
          %s678 = sshll.u32 %s663, 4
          %s679 = int_to_ptr.vmem [resolvable:$true] %s678
          %684 = dma.vmem_to_hbm [thread:$0]  %s679, 16384, %s677, %s660, 8192, 8192, 512
        $region40: #{tpu_custom_call.1} parent=27 // pred_fallthru
          _
      $region28: #{tpu_custom_call.1} parent=5 // pred_fallthru
        _
      %p685 = scmp.le.s32.totalorder 2, %s15
      // Predicated region
      $region41: #{tpu_custom_call.1} parent=5 // pred_check
        %p686 = pneg %p685
      $region42: #{tpu_custom_call.1} parent=5 // pred_check_branch
        %688 = sbr.rel (%p686) target = $region44
      $region43: #{tpu_custom_call.1} parent=5 // pred_region
        %s689 = ssub.s32 %s15, 2
        // Predicated region
        $region45: #{tpu_custom_call.1} parent=43 // pred_check
          %p690 = pneg %p118
        $region46: #{tpu_custom_call.1} parent=43 // pred_check_branch
          %692 = sbr.rel (%p690) target = $region48
        $region47: #{tpu_custom_call.1} parent=43 // pred_region
          %s693 = sand.u32 %s103, 1
          %s694 = scalar_lea.sflag [#allocation4], %s693
          %s695 = sand.u32 %s103, 1
          %s696 = smul.addr %s695, 1024
          %s697 = scalar_lea.vmem [#allocation7], %s696
          %698 = dma.done %s694, 16384
        $region48: #{tpu_custom_call.1} parent=43 // pred_fallthru
          _
      $region44: #{tpu_custom_call.1} parent=5 // pred_fallthru
        _
    $region6: #{tpu_custom_call.1} parent=1 // loop_footer
      %s19 = sadd.s32 1, %s15
    $region7: #{tpu_custom_call.1} parent=1 // loop_footer_branch
      %14 = sbr.rel target = $region3
    $region8: #{tpu_custom_call.1} parent=1 // loop_exit
      _
    %699 = vsyncpa [#allocation3], 1
    %s700 = scalar_lea.sflag [#allocation3], 1
    %701 = vsyncpa %s700, 1
    %702 = vsyncpa [#allocation6], 1
    %703 = vsyncpa [#allocation4], 1
    %s704 = scalar_lea.sflag [#allocation4], 1
    %705 = vsyncpa %s704, 1

</llo_original>
